<compile_context>
chip_gen: v5e
topology: v5e:2x2
jax: 0.10.0
libtpu: 0.0.40
codegen_flags: <defaults>
</compile_context>

<pallas_src>
import functools

import jax
import jax.numpy as jnp
from jax.experimental import pallas as pl
from jax.experimental.pallas import tpu as pltpu

_LANE = 128
_MAX_BLOCK_ROWS = 2048   # 2048 x 128 x 4 B = 1 MiB per f32 input block
_SPLIT_MIN_ROWS = 64     # below this, a 2-way split is pure per-step overhead


def _round_up(x, m):
    return (x + m - 1) // m * m


def _l1_partial_kernel(w_ref, e_ref, out_ref, *, total_rows, block_rows):
    """Per-block partial: out[8,128] = sublane-grouped sum of |w - e|."""
    diff = jnp.abs(w_ref[...].astype(jnp.float32) - e_ref[...].astype(jnp.float32))
    if total_rows % block_rows != 0:
        # Last block is ragged: rows past `total_rows` hold unspecified data
        # (no jnp.pad in HBM) -- mask them out here.
        row = jax.lax.broadcasted_iota(jnp.int32, (block_rows, _LANE), 0)
        remaining = total_rows - pl.program_id(0) * block_rows
        diff = jnp.where(row < remaining, diff, jnp.float32(0.0))
    # (block_rows,128) -> (block_rows//8, 8, 128) is a tile-aligned regroup;
    # the axis-0 sum is pure VPU adds of (8,128) vregs (no XLU, unmasked store).
    out_ref[...] = diff.reshape(block_rows // 8, 8, _LANE).sum(axis=0)


def _mch_loss_forward(w, e):
    assert w.shape == e.shape, "w and e must have the same shape"
    # .detach() only affects gradients; forward value is identical.
    e = jax.lax.stop_gradient(e)
    n_elems = w.size
    itemsize = jnp.dtype(w.dtype).itemsize
    sub_mult = 8 * max(1, 4 // itemsize)  # sublane multiple: 8 f32, 16 bf16, 32 i8

    w_flat = w.reshape(-1)
    e_flat = e.reshape(-1)
    pad = (-n_elems) % (sub_mult * _LANE)
    if pad:
        # TODO(synk): mask this sub-tile tail in-kernel too to avoid an extra
        # HBM pass; it never triggers for the module's conv-style shapes.
        w_flat = jnp.pad(w_flat, (0, pad))
        e_flat = jnp.pad(e_flat, (0, pad))
    rows = w_flat.size // _LANE  # always a multiple of sub_mult (>= 8)

    # Block selection: biggest block that amortizes per-step cost, but at least
    # two blocks for medium inputs so both v7x TensorCores get work.
    if rows > _MAX_BLOCK_ROWS:
        block_rows = _MAX_BLOCK_ROWS
    elif rows >= _SPLIT_MIN_ROWS:
        block_rows = _round_up(pl.cdiv(rows, 2), sub_mult)
    else:
        block_rows = rows  # single block == full array (tiny inputs)
    num_blocks = pl.cdiv(rows, block_rows)

    w2 = w_flat.reshape(rows, _LANE)
    e2 = e_flat.reshape(rows, _LANE)

    kernel = functools.partial(
        _l1_partial_kernel, total_rows=rows, block_rows=block_rows
    )
    partials = pl.pallas_call(
        kernel,
        out_shape=jax.ShapeDtypeStruct((num_blocks * 8, _LANE), jnp.float32),
        grid=(num_blocks,),
        in_specs=[
            pl.BlockSpec((block_rows, _LANE), lambda i: (i, 0)),
            pl.BlockSpec((block_rows, _LANE), lambda i: (i, 0)),
        ],
        out_specs=pl.BlockSpec((8, _LANE), lambda i: (i, 0)),
        compiler_params=pltpu.CompilerParams(
            dimension_semantics=("parallel",),
            vmem_limit_bytes=32 * 1024 * 1024,
        ),
        cost_estimate=pl.CostEstimate(
            flops=3 * rows * _LANE,
            transcendentals=0,
            bytes_accessed=2 * rows * _LANE * itemsize + num_blocks * 8 * _LANE * 4,
        ),
    )(w2, e2)

    # Final reduce of num_blocks*8*128 floats + 80/N scale: fused by XLA.
    total = jnp.sum(partials)
    return (jnp.float32(80.0) / jnp.float32(n_elems)) * total


@jax.custom_vjp
def mch_loss(w: jax.Array, e: jax.Array) -> jax.Array:
    """80 * mean(|w - stop_gradient(e)|), matching MCHLoss.forward.

    Note: for ultra-tiny inputs a fused XLA reduce would match this kernel's
    speed (launch cost dominates); the Pallas path is kept for uniformity.
    """
    return _mch_loss_forward(w, e)


def _mch_loss_fwd(w, e):
    return _mch_loss_forward(w, e), (w, jax.lax.stop_gradient(e))


def _mch_loss_bwd(res, g):
    w, e = res
    scale = jnp.float32(80.0) / jnp.float32(w.size)
    dw = (g * scale) * jnp.sign(w.astype(jnp.float32) - e.astype(jnp.float32))
    return dw.astype(w.dtype), jnp.zeros_like(e)  # e is detached -> zero grad


mch_loss.defvjp(_mch_loss_fwd, _mch_loss_bwd)


if __name__ == "__main__":
    key = jax.random.PRNGKey(0)
    kw, ke = jax.random.split(key)

    # Small NCHW-style shapes consistent with the module's usage.
    w = jax.random.normal(kw, (2, 4, 16, 16), dtype=jnp.float32)
    e = jax.random.normal(ke, (2, 4, 16, 16), dtype=jnp.float32)
    loss = mch_loss(w, e)
    jax.block_until_ready(loss)
    ref = 80.0 * jnp.mean(jnp.abs(w - e))
    assert jnp.allclose(loss, ref, rtol=1e-5, atol=1e-5), (loss, ref)

    # Medium shape exercising the 2-block split + ragged-last-block mask path.
    kw2, ke2 = jax.random.split(ke)
    w2 = jax.random.normal(kw2, (2, 4, 16, 136), dtype=jnp.float32)
    e2 = jax.random.normal(ke2, (2, 4, 16, 136), dtype=jnp.float32)
    loss2 = mch_loss(w2, e2)
    jax.block_until_ready(loss2)
    ref2 = 80.0 * jnp.mean(jnp.abs(w2 - e2))
    assert jnp.allclose(loss2, ref2, rtol=1e-5, atol=1e-5), (loss2, ref2)

    print("KERNEL_OK")
</pallas_src>

<mosaic_0001>
module attributes {stable_mosaic.version = 11 : i64} {
  func.func @_l1_partial_kernel(%arg0: i32, %arg1: memref<16x128xf32, #tpu.memory_space<vmem>>, %arg2: memref<16x128xf32, #tpu.memory_space<vmem>>, %arg3: memref<8x128xf32, #tpu.memory_space<vmem>>) attributes {dimension_semantics = [#tpu.dimension_semantics<parallel>], iteration_bounds = array<i64: 1>, scalar_prefetch = 0 : i64, scratch_operands = 0 : i64, tpu.core_type = #tpu.core_type<tc>, window_params = [{transform_indices = @transform_0, window_bounds = array<i64: 16, 128>}, {transform_indices = @transform_1, window_bounds = array<i64: 16, 128>}, {transform_indices = @transform_2, window_bounds = array<i64: 8, 128>}]} {
    %c0 = arith.constant 0 : index
    %c0_0 = arith.constant 0 : index
    %0 = vector.load %arg1[%c0, %c0_0] : memref<16x128xf32, #tpu.memory_space<vmem>>, vector<16x128xf32>
    %c0_1 = arith.constant 0 : index
    %c0_2 = arith.constant 0 : index
    %1 = vector.load %arg2[%c0_1, %c0_2] : memref<16x128xf32, #tpu.memory_space<vmem>>, vector<16x128xf32>
    %2 = arith.subf %0, %1 : vector<16x128xf32>
    %3 = math.absf %2 : vector<16x128xf32>
    %4 = vector.shape_cast %3 : vector<16x128xf32> to vector<2x8x128xf32>
    %cst = arith.constant dense<0.000000e+00> : vector<8x128xf32>
    %5 = vector.multi_reduction <add>, %4, %cst [0] : vector<2x8x128xf32> to vector<8x128xf32>
    %c0_3 = arith.constant 0 : index
    %c0_4 = arith.constant 0 : index
    %6 = vector.load %arg3[%c0_3, %c0_4] : memref<8x128xf32, #tpu.memory_space<vmem>>, vector<8x128xf32>
    tpu.vector_store %arg3[%c0_3, %c0_4], %5 {strides = array<i32>} : memref<8x128xf32, #tpu.memory_space<vmem>>, vector<8x128xf32>,
    return
  }
  func.func @transform_0(%arg0: i32) -> (i32, i32) {
    %c0_i32 = arith.constant 0 : i32
    %c0_i32_0 = arith.constant 0 : i32
    return %arg0, %c0_i32 : i32, i32
  }
  func.func @transform_1(%arg0: i32) -> (i32, i32) {
    %c0_i32 = arith.constant 0 : i32
    %c0_i32_0 = arith.constant 0 : i32
    return %arg0, %c0_i32 : i32, i32
  }
  func.func @transform_2(%arg0: i32) -> (i32, i32) {
    %c0_i32 = arith.constant 0 : i32
    %c0_i32_0 = arith.constant 0 : i32
    return %arg0, %c0_i32 : i32, i32
  }
}

</mosaic_0001>

<llo_original>
// kernel: tpu_custom_call.1
$region0: #{tpu_custom_call.1}
  #allocation0 [shape = 'u32[]', space=smem, size = 0x4, offset = 0x4, fixed_abs, tag = 'smem constant byte address 0x4 - core index']
  #allocation1 [shape = 'u32[72,128]{1,0:T(1,128)}', space=vmem, size = 0x9000, scoped, tag = 'internal scratch']
  %s0 = inlined_call_operand.hbm [shape: f32[16,128], index: 0, kind: input, shape index: {}]
  %s1 = inlined_call_operand.hbm [shape: f32[16,128], index: 1, kind: input, shape index: {}]
  %s2 = inlined_call_operand.hbm [shape: f32[8,128], index: 2, kind: output, shape index: {}]
  %s3 = sld [smem:[#allocation0]]
  $region26: #{tpu_custom_call.1} parent=0
    _
  %s5 = ssub.s32 1, %s3
  %s6 = scalar_select 0, %s5, %s3
  $region1: #{tpu_custom_call.1} parent=0
    #allocation2 [shape = 'u8[8192]{0}', space=vmem, size = 0x2000, scoped, tag = 'input window, operand 0, single buffered']
    #allocation3 [shape = 's32[1]{0}', space=sflag, size = 0x4, scoped, tag = 'scoped memory for tpu_custom_call.1']
    #allocation4 [shape = 's32[1]{0}', space=sflag, size = 0x4, scoped, tag = 'scoped memory for tpu_custom_call.1']
    #allocation5 [shape = 'u8[8192]{0}', space=vmem, size = 0x2000, scoped, tag = 'input window, operand 1, single buffered']
    #allocation6 [shape = 's32[1]{0}', space=sflag, size = 0x4, scoped, tag = 'scoped memory for tpu_custom_call.1']
    #allocation7 [shape = 'u8[4096]{0}', space=vmem, size = 0x1000, scoped, tag = 'output window, operand 0, single buffered']
    %7 = vsyncpa [#allocation3], 0
    %8 = vsyncpa [#allocation6], 0
    %9 = vsyncpa [#allocation4], 0
    // Predicated region
    $region2: #{tpu_custom_call.1} parent=1 // pred_check
      _
    $region3: #{tpu_custom_call.1} parent=1 // pred_check_branch
      %11 = sbr.rel (0) target = $region5
    $region4: #{tpu_custom_call.1} parent=1 // pred_region
      %13 = vsyncadd [#allocation3], 0
      %s14 = sshll.u32 %s0, 4
      %s15 = int_to_ptr.hbm [resolvable:$true] %s14
      %s16 = sshll.u32 [#allocation2], 4
      %s17 = int_to_ptr.vmem [resolvable:$true] %s16
      %22 = dma.hbm_to_vmem [thread:$0]  %s15, 256, %s17, [#allocation3], 128, 128, 8
    $region5: #{tpu_custom_call.1} parent=1 // pred_fallthru
      _
    // Predicated region
    $region6: #{tpu_custom_call.1} parent=1 // pred_check
      _
    $region7: #{tpu_custom_call.1} parent=1 // pred_check_branch
      %24 = sbr.rel (0) target = $region9
    $region8: #{tpu_custom_call.1} parent=1 // pred_region
      %26 = vsyncadd [#allocation6], 0
      %s27 = sshll.u32 %s1, 4
      %s28 = int_to_ptr.hbm [resolvable:$true] %s27
      %s29 = sshll.u32 [#allocation5], 4
      %s30 = int_to_ptr.vmem [resolvable:$true] %s29
      %35 = dma.hbm_to_vmem [thread:$0]  %s28, 256, %s30, [#allocation6], 128, 128, 8
    $region9: #{tpu_custom_call.1} parent=1 // pred_fallthru
      _
    // Predicated region
    $region10: #{tpu_custom_call.1} parent=1 // pred_check
      _
    $region11: #{tpu_custom_call.1} parent=1 // pred_check_branch
      %37 = sbr.rel (0) target = $region13
    $region12: #{tpu_custom_call.1} parent=1 // pred_region
      %39 = dma.done [#allocation3], 256
    $region13: #{tpu_custom_call.1} parent=1 // pred_fallthru
      _
    // Predicated region
    $region14: #{tpu_custom_call.1} parent=1 // pred_check
      _
    $region15: #{tpu_custom_call.1} parent=1 // pred_check_branch
      %41 = sbr.rel (0) target = $region17
    $region16: #{tpu_custom_call.1} parent=1 // pred_region
      %43 = dma.done [#allocation6], 256
    $region17: #{tpu_custom_call.1} parent=1 // pred_fallthru
      _
    %v44 = vld [vmem:[#allocation2] sm:$0xff]
    %v45 = vld [vmem:[#allocation2 + $0x8] sm:$0xff]
    %v46 = vld [vmem:[#allocation5] sm:$0xff]
    %v47 = vld [vmem:[#allocation5 + $0x8] sm:$0xff]
    %v48 = vsub.f32 %v44, %v46
    %v49 = vsub.f32 %v45, %v47
    %v50 = vand.u32 2147483647, %v48
    %v51 = vand.u32 2147483647, %v49
    %v52 = vadd.f32 %v50, %v51
    %53 = vst [vmem:[#allocation7] sm:$0xff] %v52
    // Predicated region
    $region18: #{tpu_custom_call.1} parent=1 // pred_check
      _
    $region19: #{tpu_custom_call.1} parent=1 // pred_check_branch
      %55 = sbr.rel (0) target = $region21
    $region20: #{tpu_custom_call.1} parent=1 // pred_region
      %57 = vsyncadd [#allocation4], 0
      %s59 = sshll.u32 [#allocation7], 4
      %s60 = int_to_ptr.vmem [resolvable:$true] %s59
      %s61 = sshll.u32 %s2, 4
      %s62 = int_to_ptr.hbm [resolvable:$true] %s61
      %64 = dma.vmem_to_hbm [thread:$0]  %s60, 128, %s62, [#allocation4]
    $region21: #{tpu_custom_call.1} parent=1 // pred_fallthru
      _
    // Predicated region
    $region22: #{tpu_custom_call.1} parent=1 // pred_check
      _
    $region23: #{tpu_custom_call.1} parent=1 // pred_check_branch
      %66 = sbr.rel (0) target = $region25
    $region24: #{tpu_custom_call.1} parent=1 // pred_region
      %68 = dma.done [#allocation4], 128
    $region25: #{tpu_custom_call.1} parent=1 // pred_fallthru
      _
    %69 = vsyncpa [#allocation3], 1
    %70 = vsyncpa [#allocation6], 1
    %71 = vsyncpa [#allocation4], 1

</llo_original>
